<compile_context>
chip_gen: v6e
topology: v6e:2x2x1
jax: 0.10.0
libtpu: 0.0.40
codegen_flags: <defaults>
</compile_context>

<pallas_src>
import numpy as np
import jax
import jax.numpy as jnp
from jax.experimental import pallas as pl
from jax.experimental.pallas import tpu as pltpu


def _round_up(x, m):
    return (x + m - 1) // m * m


# ----------------------------------------------------------------------------
# Pallas kernel: (BN-folded) MLP + GMF + fc + sigmoid, batch-on-lanes layout.
# All refs are (features, batch_tile) oriented; weights are (out, in).
# ----------------------------------------------------------------------------
def make_ncf_kernel(embed_dim, user_field_idx, item_field_idx):
    E = embed_dim

    def kernel(x_ref,                       # (F*E, TB)  embeddings, transposed
               w1_ref, b1_ref,              # (h1, F*E), (h1, 1)   BN-folded
               w2_ref, b2_ref,              # (h2, h1),  (h2, 1)   BN-folded
               wg_ref, wm_ref, bfc_ref,     # (1, E), (1, h2), (1, 1)
               out_ref):                    # (1, TB)
        xT = x_ref[...]                                            # (F*E, TB)

        # GMF branch: elementwise product of the user & item field embeddings.
        userT = xT[user_field_idx * E:(user_field_idx + 1) * E, :]
        itemT = xT[item_field_idx * E:(item_field_idx + 1) * E, :]
        gmfT = userT * itemT                                       # (E, TB)

        # MLP layer 1: Linear(+folded BN) -> ReLU   (Dropout = identity, eval)
        h = jnp.dot(w1_ref[...], xT,
                    preferred_element_type=jnp.float32) + b1_ref[...]
        h = jnp.maximum(h, 0.0)                                    # (h1, TB)

        # MLP layer 2: Linear(+folded BN) -> ReLU
        h = jnp.dot(w2_ref[...], h,
                    preferred_element_type=jnp.float32) + b2_ref[...]
        h = jnp.maximum(h, 0.0)                                    # (h2, TB)

        # fc(concat([gmf, mlp], dim=1)) as two split contractions; the result
        # is already lane-dense (1, TB).
        logit = (jnp.dot(wg_ref[...], gmfT, preferred_element_type=jnp.float32)
                 + jnp.dot(wm_ref[...], h, preferred_element_type=jnp.float32)
                 + bfc_ref[...])                                   # (1, TB)

        out_ref[...] = jax.nn.sigmoid(logit)

    return kernel


# ----------------------------------------------------------------------------
# Parameter construction (deterministic, in-script; torch-default inits)
# ----------------------------------------------------------------------------
def init_params(key, field_dims, embed_dim, mlp_dims):
    num_fields = len(field_dims)
    num_embeddings = int(sum(field_dims))
    embed_output_dim = num_fields * embed_dim
    h1, h2 = mlp_dims

    ks = jax.random.split(key, 4)

    # FeaturesEmbedding: xavier_uniform_
    bound_e = np.sqrt(6.0 / (num_embeddings + embed_dim))
    emb_w = jax.random.uniform(ks[0], (num_embeddings, embed_dim),
                               jnp.float32, -bound_e, bound_e)

    def linear(k, fan_in, fan_out):
        kw, kb = jax.random.split(k)
        bound = 1.0 / np.sqrt(fan_in)
        w = jax.random.uniform(kw, (fan_in, fan_out), jnp.float32, -bound, bound)
        b = jax.random.uniform(kb, (1, fan_out), jnp.float32, -bound, bound)
        return w, b

    w1, b1 = linear(ks[1], embed_output_dim, h1)
    w2, b2 = linear(ks[2], h1, h2)
    wfc, bfc = linear(ks[3], h2 + embed_dim, 1)

    def bn(dim):  # default-initialized BatchNorm1d buffers/params
        return dict(gamma=jnp.ones((1, dim), jnp.float32),
                    beta=jnp.zeros((1, dim), jnp.float32),
                    mean=jnp.zeros((1, dim), jnp.float32),
                    var=jnp.ones((1, dim), jnp.float32))

    return dict(emb_weight=emb_w,
                w1=w1, b1=b1, bn1=bn(h1),
                w2=w2, b2=b2, bn2=bn(h2),
                wfc=wfc, bfc=bfc)


# ----------------------------------------------------------------------------
# Forward wrapper: XLA gather glue + BN folding + batch-tiled pallas_call
# ----------------------------------------------------------------------------
def ncf_forward(x_idx, params, field_dims, embed_dim,
                user_field_idx=0, item_field_idx=1, bn_eps=1e-5,
                batch_tile=4096):
    # --- glue: embedding lookup in plain JAX, transposed to (F*E, B) ---
    offsets = jnp.asarray((0, *np.cumsum(field_dims)[:-1]), dtype=x_idx.dtype)
    idx = x_idx + offsets[None, :]
    emb = params["emb_weight"][idx]                              # (B, F, E)
    B, F, E = emb.shape
    FE = F * E
    emb_t = emb.reshape(B, FE).astype(jnp.float32).T             # (F*E, B)

    # Batch tiling: lane dim must be a multiple of 128; pad with zeros.
    TB = min(batch_tile, _round_up(B, 128))
    B_pad = _round_up(B, TB)
    if B_pad != B:
        emb_t = jnp.pad(emb_t, ((0, 0), (0, B_pad - B)))
    grid = (B_pad // TB,)

    # --- fold eval-mode BatchNorm into the Linear weights (wrapper-side) ---
    def fold(w, b, bnp):
        s = bnp["gamma"] * jax.lax.rsqrt(bnp["var"] + bn_eps)    # (1, out)
        w_f = w * s                                              # (in, out)
        b_f = (b - bnp["mean"]) * s + bnp["beta"]                # (1, out)
        return w_f.T, b_f.T                                      # (out, in), (out, 1)

    wt1, bt1 = fold(params["w1"], params["b1"], params["bn1"])   # (h1, FE), (h1, 1)
    wt2, bt2 = fold(params["w2"], params["b2"], params["bn2"])   # (h2, h1), (h2, 1)

    # fc weight split: torch concat order is [gmf, mlp_out] -> first E rows.
    wfc = params["wfc"]
    wg = wfc[:E, :].T                                            # (1, E)
    wm = wfc[E:, :].T                                            # (1, h2)
    bfc = params["bfc"]                                          # (1, 1)
    h1, h2 = wt1.shape[0], wt2.shape[0]

    kernel = make_ncf_kernel(E, user_field_idx, item_field_idx)

    def resident(shape):  # full-array block, VMEM-resident across grid steps
        return pl.BlockSpec(shape, lambda i: (0, 0))

    out = pl.pallas_call(
        kernel,
        out_shape=jax.ShapeDtypeStruct((1, B_pad), jnp.float32),
        grid=grid,
        in_specs=[
            pl.BlockSpec((FE, TB), lambda i: (0, i)),            # embeddings tile
            resident((h1, FE)), resident((h1, 1)),
            resident((h2, h1)), resident((h2, 1)),
            resident((1, E)), resident((1, h2)), resident((1, 1)),
        ],
        out_specs=pl.BlockSpec((1, TB), lambda i: (0, i)),       # lane-dense out
        compiler_params=pltpu.CompilerParams(
            dimension_semantics=("parallel",)),
    )(emb_t, wt1, bt1, wt2, bt2, wg, wm, bfc)

    return out[0, :B]                                            # (B,)


# ----------------------------------------------------------------------------
# Pure-JAX reference (eval-mode semantics) for validation
# ----------------------------------------------------------------------------
def ncf_reference(x_idx, params, field_dims, embed_dim,
                  user_field_idx=0, item_field_idx=1, bn_eps=1e-5):
    offsets = jnp.asarray((0, *np.cumsum(field_dims)[:-1]), dtype=x_idx.dtype)
    emb = params["emb_weight"][x_idx + offsets[None, :]]         # (B, F, E)
    B, F, E = emb.shape
    user_x = emb[:, user_field_idx, :]
    item_x = emb[:, item_field_idx, :]
    h = emb.reshape(B, F * E)

    def bn(y, p):
        return (y - p["mean"]) * p["gamma"] / jnp.sqrt(p["var"] + bn_eps) + p["beta"]

    h = jnp.maximum(bn(h @ params["w1"] + params["b1"], params["bn1"]), 0.0)
    h = jnp.maximum(bn(h @ params["w2"] + params["b2"], params["bn2"]), 0.0)
    z = jnp.concatenate([user_x * item_x, h], axis=1)
    logit = z @ params["wfc"] + params["bfc"]
    return jax.nn.sigmoid(logit)[:, 0]


# ----------------------------------------------------------------------------
if __name__ == "__main__":
    # Small, module-consistent shapes.
    field_dims = (6, 8)        # (num_users, num_items)
    embed_dim = 16
    mlp_dims = (32, 16)
    user_field_idx, item_field_idx = 0, 1
    batch = 8

    key = jax.random.PRNGKey(0)
    kp, kx = jax.random.split(key)
    params = init_params(kp, field_dims, embed_dim, mlp_dims)

    # Integer feature-id input (B, F): column 0 = user id, column 1 = item id.
    users = jax.random.randint(kx, (batch, 1), 0, field_dims[0], dtype=jnp.int32)
    items = jax.random.randint(jax.random.fold_in(kx, 1), (batch, 1), 0,
                               field_dims[1], dtype=jnp.int32)
    x = jnp.concatenate([users, items], axis=1)                  # (B, 2) int32

    out = ncf_forward(x, params, field_dims, embed_dim,
                      user_field_idx, item_field_idx)
    out = jax.block_until_ready(out)

    ref = ncf_reference(x, params, field_dims, embed_dim,
                        user_field_idx, item_field_idx)
    np.testing.assert_allclose(np.asarray(out), np.asarray(ref),
                               rtol=1e-4, atol=1e-5)
    assert out.shape == (batch,)
    print("KERNEL_OK")
</pallas_src>

<mosaic_0001>
module attributes {stable_mosaic.version = 11 : i64} {
  func.func @kernel(%arg0: i32, %arg1: memref<32x128xf32, #tpu.memory_space<vmem>>, %arg2: memref<32x32xf32, #tpu.memory_space<vmem>>, %arg3: memref<32x1xf32, #tpu.memory_space<vmem>>, %arg4: memref<16x32xf32, #tpu.memory_space<vmem>>, %arg5: memref<16x1xf32, #tpu.memory_space<vmem>>, %arg6: memref<1x16xf32, #tpu.memory_space<vmem>>, %arg7: memref<1x16xf32, #tpu.memory_space<vmem>>, %arg8: memref<1x1xf32, #tpu.memory_space<vmem>>, %arg9: memref<1x128xf32, #tpu.memory_space<vmem>>) attributes {dimension_semantics = [#tpu.dimension_semantics<parallel>], iteration_bounds = array<i64: 1>, scalar_prefetch = 0 : i64, scratch_operands = 0 : i64, tpu.core_type = #tpu.core_type<tc>, window_params = [{transform_indices = @transform_0, window_bounds = array<i64: 32, 128>}, {pipeline_mode = #tpu.pipeline_mode<synchronous>, transform_indices = @transform_1, window_bounds = array<i64: 32, 32>}, {pipeline_mode = #tpu.pipeline_mode<synchronous>, transform_indices = @transform_2, window_bounds = array<i64: 32, 1>}, {pipeline_mode = #tpu.pipeline_mode<synchronous>, transform_indices = @transform_3, window_bounds = array<i64: 16, 32>}, {pipeline_mode = #tpu.pipeline_mode<synchronous>, transform_indices = @transform_4, window_bounds = array<i64: 16, 1>}, {pipeline_mode = #tpu.pipeline_mode<synchronous>, transform_indices = @transform_5, window_bounds = array<i64: 1, 16>}, {pipeline_mode = #tpu.pipeline_mode<synchronous>, transform_indices = @transform_6, window_bounds = array<i64: 1, 16>}, {pipeline_mode = #tpu.pipeline_mode<synchronous>, transform_indices = @transform_7, window_bounds = array<i64: 1, 1>}, {transform_indices = @transform_8, window_bounds = array<i64: 1, 128>}]} {
    %c0 = arith.constant 0 : index
    %c0_0 = arith.constant 0 : index
    %0 = vector.load %arg1[%c0, %c0_0] : memref<32x128xf32, #tpu.memory_space<vmem>>, vector<32x128xf32>
    %1 = vector.extract_strided_slice %0 {offsets = [0, 0], sizes = [16, 128], strides = [1, 1]} : vector<32x128xf32> to vector<16x128xf32>
    %2 = vector.extract_strided_slice %0 {offsets = [16, 0], sizes = [16, 128], strides = [1, 1]} : vector<32x128xf32> to vector<16x128xf32>
    %3 = arith.mulf %1, %2 : vector<16x128xf32>
    %c0_1 = arith.constant 0 : index
    %c0_2 = arith.constant 0 : index
    %4 = vector.load %arg2[%c0_1, %c0_2] : memref<32x32xf32, #tpu.memory_space<vmem>>, vector<32x32xf32>
    %cst = arith.constant dense<0.000000e+00> : vector<32x128xf32>
    %5 = tpu.matmul %4, %0, %cst {dimension_numbers = #tpu.dot_dimension_numbers<[1], [0], [0], [1], [0, 0, 1, 1], [], []>} : vector<32x32xf32>, vector<32x128xf32>, vector<32x128xf32> -> vector<32x128xf32>
    %c0_3 = arith.constant 0 : index
    %c0_4 = arith.constant 0 : index
    %6 = vector.load %arg3[%c0_3, %c0_4] : memref<32x1xf32, #tpu.memory_space<vmem>>, vector<32x1xf32>
    %7 = vector.broadcast %6 : vector<32x1xf32> to vector<32x128xf32>
    %8 = arith.addf %5, %7 : vector<32x128xf32>
    %cst_5 = arith.constant 0.000000e+00 : f32
    %9 = vector.broadcast %cst_5 : f32 to vector<32x128xf32>
    %10 = arith.maximumf %8, %9 : vector<32x128xf32>
    %c0_6 = arith.constant 0 : index
    %c0_7 = arith.constant 0 : index
    %11 = vector.load %arg4[%c0_6, %c0_7] : memref<16x32xf32, #tpu.memory_space<vmem>>, vector<16x32xf32>
    %cst_8 = arith.constant dense<0.000000e+00> : vector<16x128xf32>
    %12 = tpu.matmul %11, %10, %cst_8 {dimension_numbers = #tpu.dot_dimension_numbers<[1], [0], [0], [1], [0, 0, 1, 1], [], []>} : vector<16x32xf32>, vector<32x128xf32>, vector<16x128xf32> -> vector<16x128xf32>
    %c0_9 = arith.constant 0 : index
    %c0_10 = arith.constant 0 : index
    %13 = vector.load %arg5[%c0_9, %c0_10] : memref<16x1xf32, #tpu.memory_space<vmem>>, vector<16x1xf32>
    %14 = vector.broadcast %13 : vector<16x1xf32> to vector<16x128xf32>
    %15 = arith.addf %12, %14 : vector<16x128xf32>
    %cst_11 = arith.constant 0.000000e+00 : f32
    %16 = vector.broadcast %cst_11 : f32 to vector<16x128xf32>
    %17 = arith.maximumf %15, %16 : vector<16x128xf32>
    %c0_12 = arith.constant 0 : index
    %c0_13 = arith.constant 0 : index
    %18 = vector.load %arg6[%c0_12, %c0_13] : memref<1x16xf32, #tpu.memory_space<vmem>>, vector<1x16xf32>
    %cst_14 = arith.constant dense<0.000000e+00> : vector<1x128xf32>
    %19 = tpu.matmul %18, %3, %cst_14 {dimension_numbers = #tpu.dot_dimension_numbers<[1], [0], [0], [1], [0, 0, 1, 1], [], []>} : vector<1x16xf32>, vector<16x128xf32>, vector<1x128xf32> -> vector<1x128xf32>
    %c0_15 = arith.constant 0 : index
    %c0_16 = arith.constant 0 : index
    %20 = vector.load %arg7[%c0_15, %c0_16] : memref<1x16xf32, #tpu.memory_space<vmem>>, vector<1x16xf32>
    %cst_17 = arith.constant dense<0.000000e+00> : vector<1x128xf32>
    %21 = tpu.matmul %20, %17, %cst_17 {dimension_numbers = #tpu.dot_dimension_numbers<[1], [0], [0], [1], [0, 0, 1, 1], [], []>} : vector<1x16xf32>, vector<16x128xf32>, vector<1x128xf32> -> vector<1x128xf32>
    %22 = arith.addf %19, %21 : vector<1x128xf32>
    %c0_18 = arith.constant 0 : index
    %c0_19 = arith.constant 0 : index
    %23 = vector.load %arg8[%c0_18, %c0_19] : memref<1x1xf32, #tpu.memory_space<vmem>>, vector<1x1xf32>
    %24 = vector.broadcast %23 : vector<1x1xf32> to vector<1x128xf32>
    %25 = arith.addf %22, %24 : vector<1x128xf32>
    %26 = arith.negf %25 : vector<1x128xf32>
    %27 = math.exp %26 : vector<1x128xf32>
    %cst_20 = arith.constant 1.000000e+00 : f32
    %28 = vector.broadcast %cst_20 : f32 to vector<1x128xf32>
    %29 = arith.addf %28, %27 : vector<1x128xf32>
    %30 = arith.divf %28, %29 : vector<1x128xf32>
    %c0_21 = arith.constant 0 : index
    %c0_22 = arith.constant 0 : index
    %31 = vector.load %arg9[%c0_21, %c0_22] : memref<1x128xf32, #tpu.memory_space<vmem>>, vector<1x128xf32>
    tpu.vector_store %arg9[%c0_21, %c0_22], %30 {strides = array<i32>} : memref<1x128xf32, #tpu.memory_space<vmem>>, vector<1x128xf32>,
    return
  }
  func.func @transform_0(%arg0: i32) -> (i32, i32) {
    %c0_i32 = arith.constant 0 : i32
    %c0_i32_0 = arith.constant 0 : i32
    return %c0_i32, %arg0 : i32, i32
  }
  func.func @transform_1(%arg0: i32) -> (i32, i32) {
    %c0_i32 = arith.constant 0 : i32
    %c0_i32_0 = arith.constant 0 : i32
    %c0_i32_1 = arith.constant 0 : i32
    return %c0_i32, %c0_i32_0 : i32, i32
  }
  func.func @transform_2(%arg0: i32) -> (i32, i32) {
    %c0_i32 = arith.constant 0 : i32
    %c0_i32_0 = arith.constant 0 : i32
    %c0_i32_1 = arith.constant 0 : i32
    return %c0_i32, %c0_i32_0 : i32, i32
  }
  func.func @transform_3(%arg0: i32) -> (i32, i32) {
    %c0_i32 = arith.constant 0 : i32
    %c0_i32_0 = arith.constant 0 : i32
    %c0_i32_1 = arith.constant 0 : i32
    return %c0_i32, %c0_i32_0 : i32, i32
  }
  func.func @transform_4(%arg0: i32) -> (i32, i32) {
    %c0_i32 = arith.constant 0 : i32
    %c0_i32_0 = arith.constant 0 : i32
    %c0_i32_1 = arith.constant 0 : i32
    return %c0_i32, %c0_i32_0 : i32, i32
  }
  func.func @transform_5(%arg0: i32) -> (i32, i32) {
    %c0_i32 = arith.constant 0 : i32
    %c0_i32_0 = arith.constant 0 : i32
    %c0_i32_1 = arith.constant 0 : i32
    return %c0_i32, %c0_i32_0 : i32, i32
  }
  func.func @transform_6(%arg0: i32) -> (i32, i32) {
    %c0_i32 = arith.constant 0 : i32
    %c0_i32_0 = arith.constant 0 : i32
    %c0_i32_1 = arith.constant 0 : i32
    return %c0_i32, %c0_i32_0 : i32, i32
  }
  func.func @transform_7(%arg0: i32) -> (i32, i32) {
    %c0_i32 = arith.constant 0 : i32
    %c0_i32_0 = arith.constant 0 : i32
    %c0_i32_1 = arith.constant 0 : i32
    return %c0_i32, %c0_i32_0 : i32, i32
  }
  func.func @transform_8(%arg0: i32) -> (i32, i32) {
    %c0_i32 = arith.constant 0 : i32
    %c0_i32_0 = arith.constant 0 : i32
    return %c0_i32, %arg0 : i32, i32
  }
}

</mosaic_0001>

<llo_original>
// kernel: tpu_custom_call.1
$region0: #{tpu_custom_call.1}
  #allocation0 [shape = 'u32[]', space=smem, size = 0x4, offset = 0x4, fixed_abs, tag = 'smem constant byte address 0x4 - core index']
  #allocation1 [shape = 'u32[144,128]{1,0:T(1,128)}', space=vmem, size = 0x12000, scoped, tag = 'internal scratch']
  #allocation2 [shape = 'f32[1,1]{1,0:T(1,128)S(1)}', space=vmem, size = 0x200, scoped, tag = 'scoped memory for tpu_custom_call.1']
  %s0 = inlined_call_operand.vmem [shape: f32[32,128], index: 0, kind: input, shape index: {}]
  %s1 = inlined_call_operand.hbm [shape: f32[32,32], index: 1, kind: input, shape index: {}]
  %s2 = inlined_call_operand.vmem [shape: f32[32,1], index: 2, kind: input, shape index: {}]
  %s3 = inlined_call_operand.vmem [shape: f32[16,32], index: 3, kind: input, shape index: {}]
  %s4 = inlined_call_operand.vmem [shape: f32[16,1], index: 4, kind: input, shape index: {}]
  %s5 = inlined_call_operand.vmem [shape: f32[1,16], index: 5, kind: input, shape index: {}]
  %s6 = inlined_call_operand.vmem [shape: f32[1,16], index: 6, kind: input, shape index: {}]
  %s7 = inlined_call_operand.<no memory space> [shape: f32[1,1], index: 7, kind: input, shape index: {}]
  %s8 = inlined_call_operand.hbm [shape: f32[1,128], index: 8, kind: output, shape index: {}]
  %s9 = sld [smem:[#allocation0]]
  $region46: #{tpu_custom_call.1} parent=0
    _
  %s11 = ssub.s32 1, %s9
  %s12 = scalar_select 0, %s11, %s9
  %v13 = vstv %s7
  %14 = vst [vmem:[#allocation2] sm:$0x1] %v13
  $region1: #{tpu_custom_call.1} parent=0
    #allocation3 [shape = 'u8[16384]{0}', space=vmem, size = 0x4000, scoped, tag = 'input window, operand 1, single buffered']
    #allocation4 [shape = 's32[1]{0}', space=sflag, size = 0x4, scoped, tag = 'scoped memory for tpu_custom_call.1']
    #allocation5 [shape = 's32[1]{0}', space=sflag, size = 0x4, scoped, tag = 'scoped memory for tpu_custom_call.1']
    #allocation6 [shape = 'u8[512]{0}', space=vmem, size = 0x400, scoped, tag = 'output window, operand 0, single buffered']
    %15 = vsyncpa [#allocation4], 0
    %16 = vsyncpa [#allocation5], 0
    // Predicated region
    $region2: #{tpu_custom_call.1} parent=1 // pred_check
      _
    $region3: #{tpu_custom_call.1} parent=1 // pred_check_branch
      %18 = sbr.rel (0) target = $region5
    $region4: #{tpu_custom_call.1} parent=1 // pred_region
      _
    $region5: #{tpu_custom_call.1} parent=1 // pred_fallthru
      _
    // Predicated region
    $region6: #{tpu_custom_call.1} parent=1 // pred_check
      _
    $region7: #{tpu_custom_call.1} parent=1 // pred_check_branch
      %20 = sbr.rel (0) target = $region9
    $region8: #{tpu_custom_call.1} parent=1 // pred_region
      %s22 = ssub.s32 512, 512
      %23 = vsyncadd [#allocation4], %s22
      %s24 = sshll.u32 [#allocation3], 4
      %s25 = int_to_ptr.vmem [resolvable:$true] %s24
      %30 = dma.hbm_to_vmem [thread:$0]  %s1, 512, %s25, [#allocation4], 128, 128, 8
    $region9: #{tpu_custom_call.1} parent=1 // pred_fallthru
      _
    // Predicated region
    $region10: #{tpu_custom_call.1} parent=1 // pred_check
      _
    $region11: #{tpu_custom_call.1} parent=1 // pred_check_branch
      %32 = sbr.rel (0) target = $region13
    $region12: #{tpu_custom_call.1} parent=1 // pred_region
      _
    $region13: #{tpu_custom_call.1} parent=1 // pred_fallthru
      _
    // Predicated region
    $region14: #{tpu_custom_call.1} parent=1 // pred_check
      _
    $region15: #{tpu_custom_call.1} parent=1 // pred_check_branch
      %34 = sbr.rel (0) target = $region17
    $region16: #{tpu_custom_call.1} parent=1 // pred_region
      _
    $region17: #{tpu_custom_call.1} parent=1 // pred_fallthru
      _
    // Predicated region
    $region18: #{tpu_custom_call.1} parent=1 // pred_check
      _
    $region19: #{tpu_custom_call.1} parent=1 // pred_check_branch
      %36 = sbr.rel (0) target = $region21
    $region20: #{tpu_custom_call.1} parent=1 // pred_region
      _
    $region21: #{tpu_custom_call.1} parent=1 // pred_fallthru
      _
    // Predicated region
    $region22: #{tpu_custom_call.1} parent=1 // pred_check
      _
    $region23: #{tpu_custom_call.1} parent=1 // pred_check_branch
      %38 = sbr.rel (0) target = $region25
    $region24: #{tpu_custom_call.1} parent=1 // pred_region
      _
    $region25: #{tpu_custom_call.1} parent=1 // pred_fallthru
      _
    // Predicated region
    $region26: #{tpu_custom_call.1} parent=1 // pred_check
      _
    $region27: #{tpu_custom_call.1} parent=1 // pred_check_branch
      %40 = sbr.rel (0) target = $region29
    $region28: #{tpu_custom_call.1} parent=1 // pred_region
      _
    $region29: #{tpu_custom_call.1} parent=1 // pred_fallthru
      _
    // Predicated region
    $region30: #{tpu_custom_call.1} parent=1 // pred_check
      _
    $region31: #{tpu_custom_call.1} parent=1 // pred_check_branch
      %42 = sbr.rel (0) target = $region33
    $region32: #{tpu_custom_call.1} parent=1 // pred_region
      _
    $region33: #{tpu_custom_call.1} parent=1 // pred_fallthru
      _
    // Predicated region
    $region34: #{tpu_custom_call.1} parent=1 // pred_check
      _
    $region35: #{tpu_custom_call.1} parent=1 // pred_check_branch
      %44 = sbr.rel (0) target = $region37
    $region36: #{tpu_custom_call.1} parent=1 // pred_region
      %45 = dma.done [#allocation4], 512
    $region37: #{tpu_custom_call.1} parent=1 // pred_fallthru
      _
    %v46 = vld [vmem:[%s0] sm:$0xff]
    %v47 = vld [vmem:[%s0 + $0x8] sm:$0xff]
    %v48 = vld [vmem:[%s0 + $0x10] sm:$0xff]
    %v49 = vld [vmem:[%s0 + $0x18] sm:$0xff]
    %v50 = vmul.f32 %v46, %v48
    %v51 = vmul.f32 %v47, %v49
    %v52 = vld [vmem:[#allocation3] sm:$0xff]
    %v53 = vld [vmem:[#allocation3 + $0x8] sm:$0xff]
    %v54 = vld [vmem:[#allocation3 + $0x10] sm:$0xff]
    %v55 = vld [vmem:[#allocation3 + $0x18] sm:$0xff]
    %v56 = vld [vmem:[%s2] sm:$0xff]
    %v57 = vld [vmem:[%s2 + $0x8] sm:$0xff]
    %v58 = vld [vmem:[%s2 + $0x10] sm:$0xff]
    %v59 = vld [vmem:[%s2 + $0x18] sm:$0xff]
    %61 = vset.pattern.permute.xlu0 0
    %62 = vperm.xlu0 %61, %v56
    %v63 = vpop.permute.xlu0 %62
    %66 = vset.pattern.permute.xlu0 0
    %67 = vperm.xlu0 %66, %v57
    %v68 = vpop.permute.xlu0 %67
    %71 = vset.pattern.permute.xlu0 0
    %72 = vperm.xlu0 %71, %v58
    %v73 = vpop.permute.xlu0 %72
    %76 = vset.pattern.permute.xlu0 0
    %77 = vperm.xlu0 %76, %v59
    %v78 = vpop.permute.xlu0 %77
    %vm80 = vcmask 261120
    %v82 = vsel %vm80, %v52, 0
    %v85 = vsel %vm80, %v53, 0
    %v88 = vsel %vm80, %v54, 0
    %v91 = vsel %vm80, %v55, 0
    %93 = vmatprep.subr.mxu0 0.0
    %94 = vmatpush1.msra.mxu0 0.0
    %95 = vmatprep.subr.mxu0 0.0
    %96 = vmatpush1.msra.mxu0 0.0
    %97 = vmatprep.subr.mxu0 0.0
    %98 = vmatpush1.msra.mxu0 0.0
    %99 = vmatprep.subr.mxu0 0.0
    %100 = vmatpush1.msra.mxu0 0.0
    %101 = vmatprep.subr.mxu0 0.0
    %102 = vmatpush1.msra.mxu0 0.0
    %103 = vmatprep.subr.mxu0 0.0
    %104 = vmatpush1.msra.mxu0 0.0
    %105 = vmatprep.subr.mxu0 0.0
    %106 = vmatpush1.msra.mxu0 0.0
    %107 = vmatprep.subr.mxu0 0.0
    %108 = vmatpush1.msra.mxu0 0.0
    %109 = vmatprep.subr.mxu0 0.0
    %110 = vmatpush1.msra.mxu0 0.0
    %111 = vmatprep.subr.mxu0 0.0
    %112 = vmatpush1.msra.mxu0 0.0
    %113 = vmatprep.subr.mxu0 0.0
    %114 = vmatpush1.msra.mxu0 0.0
    %115 = vmatprep.subr.mxu0 0.0
    %116 = vmatpush1.msra.mxu0 0.0
    %117 = vmatprep.subr.mxu0 0.0
    %118 = vmatpush1.msra.mxu0 %v49
    %119 = vmatprep.subr.mxu0 0.0
    %120 = vmatpush1.msra.mxu0 %v48
    %121 = vmatprep.subr.mxu0 0.0
    %122 = vmatpush1.msra.mxu0 %v47
    %123 = vmatprep.subr.mxu0 0.0
    %124 = vmatpush1.msra.mxu0 %v46
    %125 = vmatprep.subr.mxu0 0.0
    %126 = vmatpush2.msra.mxu0 0.0
    %127 = vmatprep.subr.mxu0 0.0
    %128 = vmatpush2.msra.mxu0 0.0
    %129 = vmatprep.subr.mxu0 0.0
    %130 = vmatpush2.msra.mxu0 0.0
    %131 = vmatprep.subr.mxu0 0.0
    %132 = vmatpush2.msra.mxu0 0.0
    %133 = vmatprep.subr.mxu0 0.0
    %134 = vmatpush2.msra.mxu0 0.0
    %135 = vmatprep.subr.mxu0 0.0
    %136 = vmatpush2.msra.mxu0 0.0
    %137 = vmatprep.subr.mxu0 0.0
    %138 = vmatpush2.msra.mxu0 0.0
    %139 = vmatprep.subr.mxu0 0.0
    %140 = vmatpush2.msra.mxu0 0.0
    %141 = vmatprep.subr.mxu0 0.0
    %142 = vmatpush2.msra.mxu0 0.0
    %143 = vmatprep.subr.mxu0 0.0
    %144 = vmatpush2.msra.mxu0 0.0
    %145 = vmatprep.subr.mxu0 0.0
    %146 = vmatpush2.msra.mxu0 0.0
    %147 = vmatprep.subr.mxu0 0.0
    %148 = vmatpush2.msra.mxu0 0.0
    %149 = vmatprep.subr.mxu0 0.0
    %150 = vmatpush2.msra.mxu0 0.0
    %151 = vmatprep.subr.mxu0 0.0
    %152 = vmatpush2.msra.mxu0 0.0
    %153 = vmatprep.subr.mxu0 0.0
    %154 = vmatpush2.msra.mxu0 0.0
    %155 = vmatprep.subr.mxu0 0.0
    %156 = vmatpush2.msra.mxu0 0.0
    %157 = vmatprep.mubr.f32.mxu0 0.0
    %158 = vmatmul.mubr.f32.gmra.mxu0 %v82
    %v159 = vpop.f32.mrf.mxu0
    %v160 = vadd.f32 %v63, %v159
    %v161 = vpop.f32.mrf.mxu0
    %162 = vmatprep.mubr.f32.mxu0 0.0
    %163 = vmatmul.mubr.f32.gmra.mxu0 %v85
    %v164 = vpop.f32.mrf.mxu0
    %v165 = vadd.f32 %v68, %v164
    %v166 = vpop.f32.mrf.mxu0
    %167 = vmatprep.mubr.f32.mxu0 0.0
    %168 = vmatmul.mubr.f32.gmra.mxu0 %v88
    %v169 = vpop.f32.mrf.mxu0
    %v170 = vadd.f32 %v73, %v169
    %v171 = vpop.f32.mrf.mxu0
    %172 = vmatprep.mubr.f32.mxu0 0.0
    %173 = vmatmul.mubr.f32.gmra.mxu0 %v91
    %v174 = vpop.f32.mrf.mxu0
    %v175 = vadd.f32 %v78, %v174
    %v176 = vpop.f32.mrf.mxu0
    %177 = vdwg.mxu0
    %v178 = vmax.f32 %v160, 0.0
    %v179 = vmax.f32 %v165, 0.0
    %v180 = vmax.f32 %v170, 0.0
    %v181 = vmax.f32 %v175, 0.0
    %v182 = vld [vmem:[%s3] sm:$0xff]
    %v183 = vld [vmem:[%s3 + $0x8] sm:$0xff]
    %v184 = vld [vmem:[%s4] sm:$0xff]
    %v185 = vld [vmem:[%s4 + $0x8] sm:$0xff]
    %187 = vset.pattern.permute.xlu0 0
    %188 = vperm.xlu0 %187, %v184
    %v189 = vpop.permute.xlu0 %188
    %192 = vset.pattern.permute.xlu0 0
    %193 = vperm.xlu0 %192, %v185
    %v194 = vpop.permute.xlu0 %193
    %v197 = vsel %vm80, %v182, 0
    %v200 = vsel %vm80, %v183, 0
    %202 = vmatprep.subr.mxu0 0.0
    %203 = vmatpush1.msra.mxu0 0.0
    %204 = vmatprep.subr.mxu0 0.0
    %205 = vmatpush1.msra.mxu0 0.0
    %206 = vmatprep.subr.mxu0 0.0
    %207 = vmatpush1.msra.mxu0 0.0
    %208 = vmatprep.subr.mxu0 0.0
    %209 = vmatpush1.msra.mxu0 0.0
    %210 = vmatprep.subr.mxu0 0.0
    %211 = vmatpush1.msra.mxu0 0.0
    %212 = vmatprep.subr.mxu0 0.0
    %213 = vmatpush1.msra.mxu0 0.0
    %214 = vmatprep.subr.mxu0 0.0
    %215 = vmatpush1.msra.mxu0 0.0
    %216 = vmatprep.subr.mxu0 0.0
    %217 = vmatpush1.msra.mxu0 0.0
    %218 = vmatprep.subr.mxu0 0.0
    %219 = vmatpush1.msra.mxu0 0.0
    %220 = vmatprep.subr.mxu0 0.0
    %221 = vmatpush1.msra.mxu0 0.0
    %222 = vmatprep.subr.mxu0 0.0
    %223 = vmatpush1.msra.mxu0 0.0
    %224 = vmatprep.subr.mxu0 0.0
    %225 = vmatpush1.msra.mxu0 0.0
    %226 = vmatprep.subr.mxu0 0.0
    %227 = vmatpush1.msra.mxu0 %v181
    %228 = vmatprep.subr.mxu0 0.0
    %229 = vmatpush1.msra.mxu0 %v180
    %230 = vmatprep.subr.mxu0 0.0
    %231 = vmatpush1.msra.mxu0 %v179
    %232 = vmatprep.subr.mxu0 0.0
    %233 = vmatpush1.msra.mxu0 %v178
    %234 = vmatprep.subr.mxu0 0.0
    %235 = vmatpush2.msra.mxu0 0.0
    %236 = vmatprep.subr.mxu0 0.0
    %237 = vmatpush2.msra.mxu0 0.0
    %238 = vmatprep.subr.mxu0 0.0
    %239 = vmatpush2.msra.mxu0 0.0
    %240 = vmatprep.subr.mxu0 0.0
    %241 = vmatpush2.msra.mxu0 0.0
    %242 = vmatprep.subr.mxu0 0.0
    %243 = vmatpush2.msra.mxu0 0.0
    %244 = vmatprep.subr.mxu0 0.0
    %245 = vmatpush2.msra.mxu0 0.0
    %246 = vmatprep.subr.mxu0 0.0
    %247 = vmatpush2.msra.mxu0 0.0
    %248 = vmatprep.subr.mxu0 0.0
    %249 = vmatpush2.msra.mxu0 0.0
    %250 = vmatprep.subr.mxu0 0.0
    %251 = vmatpush2.msra.mxu0 0.0
    %252 = vmatprep.subr.mxu0 0.0
    %253 = vmatpush2.msra.mxu0 0.0
    %254 = vmatprep.subr.mxu0 0.0
    %255 = vmatpush2.msra.mxu0 0.0
    %256 = vmatprep.subr.mxu0 0.0
    %257 = vmatpush2.msra.mxu0 0.0
    %258 = vmatprep.subr.mxu0 0.0
    %259 = vmatpush2.msra.mxu0 0.0
    %260 = vmatprep.subr.mxu0 0.0
    %261 = vmatpush2.msra.mxu0 0.0
    %262 = vmatprep.subr.mxu0 0.0
    %263 = vmatpush2.msra.mxu0 0.0
    %264 = vmatprep.subr.mxu0 0.0
    %265 = vmatpush2.msra.mxu0 0.0
    %266 = vmatprep.mubr.f32.mxu0 0.0
    %267 = vmatmul.mubr.f32.gmra.mxu0 %v197
    %v268 = vpop.f32.mrf.mxu0
    %v269 = vadd.f32 %v189, %v268
    %v270 = vpop.f32.mrf.mxu0
    %271 = vmatprep.mubr.f32.mxu0 0.0
    %272 = vmatmul.mubr.f32.gmra.mxu0 %v200
    %v273 = vpop.f32.mrf.mxu0
    %v274 = vadd.f32 %v194, %v273
    %v275 = vpop.f32.mrf.mxu0
    %276 = vdwg.mxu0
    %v277 = vmax.f32 %v269, 0.0
    %v278 = vmax.f32 %v274, 0.0
    %v279 = vld [vmem:[%s5] sm:$0x1]
    %v280 = vld [vmem:[%s6] sm:$0x1]
    %vm281 = vcmask 130048
    %v283 = vsel %vm281, %v280, 0
    %285 = vmatprep.subr.mxu0 0.0
    %286 = vmatpush1.msra.mxu0 0.0
    %287 = vmatprep.subr.mxu0 0.0
    %288 = vmatpush1.msra.mxu0 0.0
    %289 = vmatprep.subr.mxu0 0.0
    %290 = vmatpush1.msra.mxu0 0.0
    %291 = vmatprep.subr.mxu0 0.0
    %292 = vmatpush1.msra.mxu0 0.0
    %293 = vmatprep.subr.mxu0 0.0
    %294 = vmatpush1.msra.mxu0 0.0
    %295 = vmatprep.subr.mxu0 0.0
    %296 = vmatpush1.msra.mxu0 0.0
    %297 = vmatprep.subr.mxu0 0.0
    %298 = vmatpush1.msra.mxu0 0.0
    %299 = vmatprep.subr.mxu0 0.0
    %300 = vmatpush1.msra.mxu0 0.0
    %301 = vmatprep.subr.mxu0 0.0
    %302 = vmatpush1.msra.mxu0 0.0
    %303 = vmatprep.subr.mxu0 0.0
    %304 = vmatpush1.msra.mxu0 0.0
    %305 = vmatprep.subr.mxu0 0.0
    %306 = vmatpush1.msra.mxu0 0.0
    %307 = vmatprep.subr.mxu0 0.0
    %308 = vmatpush1.msra.mxu0 0.0
    %309 = vmatprep.subr.mxu0 0.0
    %310 = vmatpush1.msra.mxu0 0.0
    %311 = vmatprep.subr.mxu0 0.0
    %312 = vmatpush1.msra.mxu0 0.0
    %313 = vmatprep.subr.mxu0 0.0
    %314 = vmatpush1.msra.mxu0 %v278
    %315 = vmatprep.subr.mxu0 0.0
    %316 = vmatpush1.msra.mxu0 %v277
    %317 = vmatprep.subr.mxu0 0.0
    %318 = vmatpush2.msra.mxu0 0.0
    %319 = vmatprep.subr.mxu0 0.0
    %320 = vmatpush2.msra.mxu0 0.0
    %321 = vmatprep.subr.mxu0 0.0
    %322 = vmatpush2.msra.mxu0 0.0
    %323 = vmatprep.subr.mxu0 0.0
    %324 = vmatpush2.msra.mxu0 0.0
    %325 = vmatprep.subr.mxu0 0.0
    %326 = vmatpush2.msra.mxu0 0.0
    %327 = vmatprep.subr.mxu0 0.0
    %328 = vmatpush2.msra.mxu0 0.0
    %329 = vmatprep.subr.mxu0 0.0
    %330 = vmatpush2.msra.mxu0 0.0
    %331 = vmatprep.subr.mxu0 0.0
    %332 = vmatpush2.msra.mxu0 0.0
    %333 = vmatprep.subr.mxu0 0.0
    %334 = vmatpush2.msra.mxu0 0.0
    %335 = vmatprep.subr.mxu0 0.0
    %336 = vmatpush2.msra.mxu0 0.0
    %337 = vmatprep.subr.mxu0 0.0
    %338 = vmatpush2.msra.mxu0 0.0
    %339 = vmatprep.subr.mxu0 0.0
    %340 = vmatpush2.msra.mxu0 0.0
    %341 = vmatprep.subr.mxu0 0.0
    %342 = vmatpush2.msra.mxu0 0.0
    %343 = vmatprep.subr.mxu0 0.0
    %344 = vmatpush2.msra.mxu0 0.0
    %345 = vmatprep.subr.mxu0 0.0
    %346 = vmatpush2.msra.mxu0 0.0
    %347 = vmatprep.subr.mxu0 0.0
    %348 = vmatpush2.msra.mxu0 0.0
    %349 = vmatprep.mubr.f32.mxu0 0.0
    %350 = vmatmul.mubr.f32.gmra.mxu0 %v283
    %v351 = vpop.f32.mrf.mxu0
    %v352 = vadd.f32 0.0, %v351
    %v353 = vpop.f32.mrf.mxu0
    %354 = vdwg.mxu0
    %v356 = vsel %vm281, %v279, 0
    %358 = vmatprep.subr.mxu0 0.0
    %359 = vmatpush1.msra.mxu0 0.0
    %360 = vmatprep.subr.mxu0 0.0
    %361 = vmatpush1.msra.mxu0 0.0
    %362 = vmatprep.subr.mxu0 0.0
    %363 = vmatpush1.msra.mxu0 0.0
    %364 = vmatprep.subr.mxu0 0.0
    %365 = vmatpush1.msra.mxu0 0.0
    %366 = vmatprep.subr.mxu0 0.0
    %367 = vmatpush1.msra.mxu0 0.0
    %368 = vmatprep.subr.mxu0 0.0
    %369 = vmatpush1.msra.mxu0 0.0
    %370 = vmatprep.subr.mxu0 0.0
    %371 = vmatpush1.msra.mxu0 0.0
    %372 = vmatprep.subr.mxu0 0.0
    %373 = vmatpush1.msra.mxu0 0.0
    %374 = vmatprep.subr.mxu0 0.0
    %375 = vmatpush1.msra.mxu0 0.0
    %376 = vmatprep.subr.mxu0 0.0
    %377 = vmatpush1.msra.mxu0 0.0
    %378 = vmatprep.subr.mxu0 0.0
    %379 = vmatpush1.msra.mxu0 0.0
    %380 = vmatprep.subr.mxu0 0.0
    %381 = vmatpush1.msra.mxu0 0.0
    %382 = vmatprep.subr.mxu0 0.0
    %383 = vmatpush1.msra.mxu0 0.0
    %384 = vmatprep.subr.mxu0 0.0
    %385 = vmatpush1.msra.mxu0 0.0
    %386 = vmatprep.subr.mxu0 0.0
    %387 = vmatpush1.msra.mxu0 %v51
    %388 = vmatprep.subr.mxu0 0.0
    %389 = vmatpush1.msra.mxu0 %v50
    %390 = vmatprep.subr.mxu0 0.0
    %391 = vmatpush2.msra.mxu0 0.0
    %392 = vmatprep.subr.mxu0 0.0
    %393 = vmatpush2.msra.mxu0 0.0
    %394 = vmatprep.subr.mxu0 0.0
    %395 = vmatpush2.msra.mxu0 0.0
    %396 = vmatprep.subr.mxu0 0.0
    %397 = vmatpush2.msra.mxu0 0.0
    %398 = vmatprep.subr.mxu0 0.0
    %399 = vmatpush2.msra.mxu0 0.0
    %400 = vmatprep.subr.mxu0 0.0
    %401 = vmatpush2.msra.mxu0 0.0
    %402 = vmatprep.subr.mxu0 0.0
    %403 = vmatpush2.msra.mxu0 0.0
    %404 = vmatprep.subr.mxu0 0.0
    %405 = vmatpush2.msra.mxu0 0.0
    %406 = vmatprep.subr.mxu0 0.0
    %407 = vmatpush2.msra.mxu0 0.0
    %408 = vmatprep.subr.mxu0 0.0
    %409 = vmatpush2.msra.mxu0 0.0
    %410 = vmatprep.subr.mxu0 0.0
    %411 = vmatpush2.msra.mxu0 0.0
    %412 = vmatprep.subr.mxu0 0.0
    %413 = vmatpush2.msra.mxu0 0.0
    %414 = vmatprep.subr.mxu0 0.0
    %415 = vmatpush2.msra.mxu0 0.0
    %416 = vmatprep.subr.mxu0 0.0
    %417 = vmatpush2.msra.mxu0 0.0
    %418 = vmatprep.subr.mxu0 0.0
    %419 = vmatpush2.msra.mxu0 0.0
    %420 = vmatprep.subr.mxu0 0.0
    %421 = vmatpush2.msra.mxu0 0.0
    %422 = vmatprep.mubr.f32.mxu0 0.0
    %423 = vmatmul.mubr.f32.gmra.mxu0 %v356
    %v424 = vpop.f32.mrf.mxu0
    %v425 = vadd.f32 %v352, %v424
    %v426 = vpop.f32.mrf.mxu0
    %427 = vdwg.mxu0
    %v428 = vld [vmem:[#allocation2] sm:$0x1]
    %430 = vset.pattern.permute.xlu0 0
    %431 = vperm.xlu0 %430, %v428
    %v432 = vpop.permute.xlu0 %431
    %v434 = vlaneseq
    %v435 = vshrl.u32 %v434, 7
    %v436 = vsub.s32 0, %v435
    %v437 = vrot.slane %v432, %v436
    %v438 = vadd.f32 %v425, %v437
    %v439 = vxor.u32 %v438, 2147483648
    %v440 = vmul.f32 %v439, 1.442695
    %v441 = vpow.pop %v440
    %v442 = vadd.f32 %v441, 1.0
    %v443 = vrcp.pop %v442
    %v444 = vmul.f32 1.0, %v443
    %445 = vst [vmem:[#allocation6] sm:$0x1] %v444
    // Predicated region
    $region38: #{tpu_custom_call.1} parent=1 // pred_check
      _
    $region39: #{tpu_custom_call.1} parent=1 // pred_check_branch
      %447 = sbr.rel (0) target = $region41
    $region40: #{tpu_custom_call.1} parent=1 // pred_region
      %s449 = ssub.s32 16, 16
      %450 = vsyncadd [#allocation5], %s449
      %s452 = sshll.u32 [#allocation6], 4
      %s453 = int_to_ptr.vmem [resolvable:$true] %s452
      %455 = dma.vmem_to_hbm [thread:$0]  %s453, 16, %s8, [#allocation5]
    $region41: #{tpu_custom_call.1} parent=1 // pred_fallthru
      _
    // Predicated region
    $region42: #{tpu_custom_call.1} parent=1 // pred_check
      _
    $region43: #{tpu_custom_call.1} parent=1 // pred_check_branch
      %457 = sbr.rel (0) target = $region45
    $region44: #{tpu_custom_call.1} parent=1 // pred_region
      %458 = dma.done [#allocation5], 16
    $region45: #{tpu_custom_call.1} parent=1 // pred_fallthru
      _
    %459 = vsyncpa [#allocation4], 1
    %460 = vsyncpa [#allocation5], 1

</llo_original>
